<compile_context>
chip_gen: v5e
topology: v5e:2x2
jax: 0.10.0
libtpu: 0.0.40
codegen_flags: <defaults>
</compile_context>

<pallas_src>
import functools

import jax
import jax.numpy as jnp
from jax import lax
from jax.experimental import pallas as pl
from jax.experimental.pallas import tpu as pltpu

H_PAD = 128  # padded (lane-dense) feature width for hidden activations / weights


def encoder_kernel(data_ref, w1_ref, w_ref, b_ref, out_ref, acc_ref,
                   *, n_rows, tile_n, need_mask):
    pid = pl.program_id(0)

    @pl.when(pid == 0)
    def _init():
        acc_ref[...] = jnp.zeros_like(acc_ref)

    # ---- net1 layers 1-2 on this tile of rows ----
    x = data_ref[...]                                                   # (TN, d_in)
    h = jnp.dot(x, w1_ref[...], preferred_element_type=jnp.float32) + b_ref[0:1, :]
    h = jnp.maximum(h, 0.0)
    h = jnp.dot(h, w_ref[0], preferred_element_type=jnp.float32) + b_ref[1:2, :]
    h = jnp.maximum(h, 0.0)                                             # (TN, 128)

    if need_mask:  # static decision: zero out rows past the true N (padding rows)
        row = pid * tile_n + lax.broadcasted_iota(jnp.int32, (tile_n, 1), 0)
        h = jnp.where(row < n_rows, h, 0.0)

    # ---- row-sum on the MXU (ones-GEMV) instead of a cross-sublane XLU reduce ----
    ones = jnp.ones((1, tile_n), jnp.float32)
    acc_ref[...] += jnp.dot(ones, h, preferred_element_type=jnp.float32)

    # ---- last tile: finish net1 via linearity (sum commutes with w3), run net2 ----
    @pl.when(pid == pl.num_programs(0) - 1)
    def _finish():
        s = acc_ref[...]                                                # (1, 128)
        z = (jnp.dot(s, w_ref[1], preferred_element_type=jnp.float32)
             + jnp.float32(n_rows) * b_ref[2:3, :])                     # sum of N biases
        h2 = jnp.maximum(jnp.dot(z, w_ref[2], preferred_element_type=jnp.float32)
                         + b_ref[3:4, :], 0.0)
        h2 = jnp.maximum(jnp.dot(h2, w_ref[3], preferred_element_type=jnp.float32)
                         + b_ref[4:5, :], 0.0)
        out_ref[...] = (jnp.dot(h2, w_ref[4], preferred_element_type=jnp.float32)
                        + b_ref[5:6, :])                                # (1, 128)


def pack_params(params):
    """Pack 12 weight/bias tensors into 3 lane-dense slabs (zero padded)."""
    d_in, h1 = params["w1"].shape
    w1p = jnp.zeros((d_in, H_PAD), jnp.float32).at[:, :h1].set(params["w1"])

    wslab = jnp.zeros((5, H_PAD, H_PAD), jnp.float32)
    for k, name in enumerate(["w2", "w3", "w4", "w5", "w6"]):
        w = params[name]
        wslab = wslab.at[k, :w.shape[0], :w.shape[1]].set(w)

    bslab = jnp.zeros((8, H_PAD), jnp.float32)
    for k, name in enumerate(["b1", "b2", "b3", "b4", "b5", "b6"]):
        b = params[name].reshape(-1)
        bslab = bslab.at[k, :b.shape[0]].set(b)
    return w1p, wslab, bslab


def encoder_forward(data, params, *, tile_n=512):
    """data: (N, 2*s_dim + a_dim) -> (2*z_dim,).  tile_n must be a multiple of 8."""
    n, d_in = data.shape
    two_z = params["w6"].shape[1]

    tile_n = min(tile_n, max(8, ((n + 7) // 8) * 8))   # clamp for small N (stays %8==0)
    n_tiles = pl.cdiv(n, tile_n)
    n_pad = n_tiles * tile_n

    data_p = data.astype(jnp.float32)
    if n_pad != n:
        data_p = jnp.zeros((n_pad, d_in), jnp.float32).at[:n].set(data_p)

    w1p, wslab, bslab = pack_params(params)

    kernel = functools.partial(encoder_kernel, n_rows=n, tile_n=tile_n,
                               need_mask=(n_pad != n))

    out = pl.pallas_call(
        kernel,
        out_shape=jax.ShapeDtypeStruct((1, H_PAD), jnp.float32),
        grid_spec=pltpu.PrefetchScalarGridSpec(
            num_scalar_prefetch=0,
            grid=(n_tiles,),
            in_specs=[
                pl.BlockSpec((tile_n, d_in), lambda i: (i, 0)),        # streamed rows
                pl.BlockSpec((d_in, H_PAD), lambda i: (0, 0)),         # w1 (resident)
                pl.BlockSpec((5, H_PAD, H_PAD), lambda i: (0, 0, 0)),  # w2..w6 slab
                pl.BlockSpec((8, H_PAD), lambda i: (0, 0)),            # b1..b6 slab
            ],
            out_specs=pl.BlockSpec((1, H_PAD), lambda i: (0, 0)),
            scratch_shapes=[pltpu.VMEM((1, H_PAD), jnp.float32)],      # sum(relu2) acc
        ),
        compiler_params=pltpu.CompilerParams(
            dimension_semantics=("arbitrary",)),
    )(data_p, w1p, wslab, bslab)
    return out[0, :two_z]                                              # (2*z_dim,)


def init_params(key, s_dim, a_dim, z_dim, h_dim=32):
    """nn.Linear-style init; weights stored as (in, out) == torch weight transposed."""
    zz = 2 * z_dim
    d_in = 2 * s_dim + a_dim
    dims = [
        ("w1", "b1", d_in, h_dim),
        ("w2", "b2", h_dim, h_dim),
        ("w3", "b3", h_dim, zz),
        ("w4", "b4", zz, h_dim),
        ("w5", "b5", h_dim, h_dim),
        ("w6", "b6", h_dim, 2 * z_dim),
    ]
    params = {}
    for wname, bname, fin, fout in dims:
        key, kw, kb = jax.random.split(key, 3)
        bound = 1.0 / jnp.sqrt(jnp.float32(fin))
        params[wname] = jax.random.uniform(kw, (fin, fout), jnp.float32,
                                           minval=-bound, maxval=bound)
        params[bname] = jax.random.uniform(kb, (1, fout), jnp.float32,
                                           minval=-bound, maxval=bound)
    return params


def encoder_reference(data, p):
    """Plain-JAX reference of the PyTorch forward."""
    h = jnp.maximum(data @ p["w1"] + p["b1"], 0.0)
    h = jnp.maximum(h @ p["w2"] + p["b2"], 0.0)
    z = h @ p["w3"] + p["b3"]
    s = jnp.sum(z, axis=0, keepdims=True)
    h2 = jnp.maximum(s @ p["w4"] + p["b4"], 0.0)
    h2 = jnp.maximum(h2 @ p["w5"] + p["b5"], 0.0)
    return (h2 @ p["w6"] + p["b6"])[0]


if __name__ == "__main__":
    s_dim, a_dim, z_dim = 5, 6, 4          # input dim = 2*5 + 6 = 16
    key = jax.random.PRNGKey(0)
    kp, kd1, kd2 = jax.random.split(key, 3)
    params = init_params(kp, s_dim, a_dim, z_dim)

    # Case 1: tiny N (single tile, no masking).
    data_small = jax.random.normal(kd1, (8, 2 * s_dim + a_dim), jnp.float32)
    out_small = jax.block_until_ready(encoder_forward(data_small, params))
    ref_small = encoder_reference(data_small, params)
    assert out_small.shape == (2 * z_dim,)
    assert jnp.allclose(out_small, ref_small, atol=1e-4, rtol=1e-4), (out_small, ref_small)

    # Case 2: larger ragged N (multiple grid tiles + remainder masking + accumulator).
    data_big = jax.random.normal(kd2, (200, 2 * s_dim + a_dim), jnp.float32)
    out_big = jax.block_until_ready(encoder_forward(data_big, params, tile_n=64))
    ref_big = encoder_reference(data_big, params)
    assert out_big.shape == (2 * z_dim,)
    assert jnp.allclose(out_big, ref_big, atol=1e-4, rtol=1e-4), (out_big, ref_big)

    print("KERNEL_OK")
</pallas_src>

<mosaic_0001>
module attributes {stable_mosaic.version = 11 : i64} {
  func.func @encoder_kernel(%arg0: i32, %arg1: memref<8x16xf32, #tpu.memory_space<vmem>>, %arg2: memref<16x128xf32, #tpu.memory_space<vmem>>, %arg3: memref<5x128x128xf32, #tpu.memory_space<vmem>>, %arg4: memref<8x128xf32, #tpu.memory_space<vmem>>, %arg5: memref<1x128xf32, #tpu.memory_space<vmem>>, %arg6: memref<1x128xf32, #tpu.memory_space<vmem>>) attributes {dimension_semantics = [#tpu.dimension_semantics<arbitrary>], iteration_bounds = array<i64: 1>, scalar_prefetch = 0 : i64, scratch_operands = 1 : i64, tpu.core_type = #tpu.core_type<tc>, window_params = [{transform_indices = @transform_0, window_bounds = array<i64: 8, 16>}, {pipeline_mode = #tpu.pipeline_mode<synchronous>, transform_indices = @transform_1, window_bounds = array<i64: 16, 128>}, {pipeline_mode = #tpu.pipeline_mode<synchronous>, transform_indices = @transform_2, window_bounds = array<i64: 5, 128, 128>}, {pipeline_mode = #tpu.pipeline_mode<synchronous>, transform_indices = @transform_3, window_bounds = array<i64: 8, 128>}, {pipeline_mode = #tpu.pipeline_mode<synchronous>, transform_indices = @transform_4, window_bounds = array<i64: 1, 128>}]} {
    %c0_i32 = arith.constant 0 : i32
    %0 = arith.cmpi eq, %arg0, %c0_i32 : i32
    %1 = arith.extui %0 : i1 to i32
    %c0_i32_0 = arith.constant 0 : i32
    %2 = arith.cmpi ne, %1, %c0_i32_0 : i32
    scf.if %2 {
      %cst_21 = arith.constant 0.000000e+00 : f32
      %27 = vector.broadcast %cst_21 : f32 to vector<1x128xf32>
      %c0_22 = arith.constant 0 : index
      %c0_23 = arith.constant 0 : index
      %28 = vector.load %arg6[%c0_22, %c0_23] : memref<1x128xf32, #tpu.memory_space<vmem>>, vector<1x128xf32>
      tpu.vector_store %arg6[%c0_22, %c0_23], %27 {strides = array<i32>} : memref<1x128xf32, #tpu.memory_space<vmem>>, vector<1x128xf32>,
    } else {
    }
    %c0 = arith.constant 0 : index
    %c0_1 = arith.constant 0 : index
    %3 = vector.load %arg1[%c0, %c0_1] : memref<8x16xf32, #tpu.memory_space<vmem>>, vector<8x16xf32>
    %c0_2 = arith.constant 0 : index
    %c0_3 = arith.constant 0 : index
    %4 = vector.load %arg2[%c0_2, %c0_3] : memref<16x128xf32, #tpu.memory_space<vmem>>, vector<16x128xf32>
    %cst = arith.constant dense<0.000000e+00> : vector<8x128xf32>
    %5 = tpu.matmul %3, %4, %cst {dimension_numbers = #tpu.dot_dimension_numbers<[1], [0], [0], [1], [0, 0, 1, 1], [], []>} : vector<8x16xf32>, vector<16x128xf32>, vector<8x128xf32> -> vector<8x128xf32>
    %c0_4 = arith.constant 0 : index
    %c0_5 = arith.constant 0 : index
    %6 = vector.load %arg4[%c0_4, %c0_5] : memref<8x128xf32, #tpu.memory_space<vmem>>, vector<1x128xf32>
    %7 = vector.broadcast %6 : vector<1x128xf32> to vector<8x128xf32>
    %8 = arith.addf %5, %7 : vector<8x128xf32>
    %cst_6 = arith.constant 0.000000e+00 : f32
    %9 = vector.broadcast %cst_6 : f32 to vector<8x128xf32>
    %10 = arith.maximumf %8, %9 : vector<8x128xf32>
    %c0_7 = arith.constant 0 : index
    %c0_8 = arith.constant 0 : index
    %c0_9 = arith.constant 0 : index
    %11 = vector.load %arg3[%c0_7, %c0_8, %c0_9] : memref<5x128x128xf32, #tpu.memory_space<vmem>>, vector<1x128x128xf32>
    %12 = vector.shape_cast %11 : vector<1x128x128xf32> to vector<128x128xf32>
    %cst_10 = arith.constant dense<0.000000e+00> : vector<8x128xf32>
    %13 = tpu.matmul %10, %12, %cst_10 {dimension_numbers = #tpu.dot_dimension_numbers<[1], [0], [0], [1], [0, 0, 1, 1], [], []>} : vector<8x128xf32>, vector<128x128xf32>, vector<8x128xf32> -> vector<8x128xf32>
    %c1 = arith.constant 1 : index
    %c0_11 = arith.constant 0 : index
    %14 = vector.load %arg4[%c1, %c0_11] : memref<8x128xf32, #tpu.memory_space<vmem>>, vector<1x128xf32>
    %15 = vector.broadcast %14 : vector<1x128xf32> to vector<8x128xf32>
    %16 = arith.addf %13, %15 : vector<8x128xf32>
    %cst_12 = arith.constant 0.000000e+00 : f32
    %17 = vector.broadcast %cst_12 : f32 to vector<8x128xf32>
    %18 = arith.maximumf %16, %17 : vector<8x128xf32>
    %cst_13 = arith.constant 1.000000e+00 : f32
    %19 = vector.broadcast %cst_13 : f32 to vector<1x8xf32>
    %c0_14 = arith.constant 0 : index
    %c0_15 = arith.constant 0 : index
    %20 = vector.load %arg6[%c0_14, %c0_15] : memref<1x128xf32, #tpu.memory_space<vmem>>, vector<1x128xf32>
    %cst_16 = arith.constant dense<0.000000e+00> : vector<1x128xf32>
    %21 = tpu.matmul %19, %18, %cst_16 {dimension_numbers = #tpu.dot_dimension_numbers<[1], [0], [0], [1], [0, 0, 1, 1], [], []>} : vector<1x8xf32>, vector<8x128xf32>, vector<1x128xf32> -> vector<1x128xf32>
    %22 = arith.addf %20, %21 : vector<1x128xf32>
    %c0_17 = arith.constant 0 : index
    %c0_18 = arith.constant 0 : index
    %23 = vector.load %arg6[%c0_17, %c0_18] : memref<1x128xf32, #tpu.memory_space<vmem>>, vector<1x128xf32>
    tpu.vector_store %arg6[%c0_17, %c0_18], %22 {strides = array<i32>} : memref<1x128xf32, #tpu.memory_space<vmem>>, vector<1x128xf32>,
    %c0_i32_19 = arith.constant 0 : i32
    %24 = arith.cmpi eq, %arg0, %c0_i32_19 : i32
    %25 = arith.extui %24 : i1 to i32
    %c0_i32_20 = arith.constant 0 : i32
    %26 = arith.cmpi ne, %25, %c0_i32_20 : i32
    scf.if %26 {
      %c0_21 = arith.constant 0 : index
      %c0_22 = arith.constant 0 : index
      %27 = vector.load %arg6[%c0_21, %c0_22] : memref<1x128xf32, #tpu.memory_space<vmem>>, vector<1x128xf32>
      %c1_23 = arith.constant 1 : index
      %c0_24 = arith.constant 0 : index
      %c0_25 = arith.constant 0 : index
      %28 = vector.load %arg3[%c1_23, %c0_24, %c0_25] : memref<5x128x128xf32, #tpu.memory_space<vmem>>, vector<1x128x128xf32>
      %29 = vector.shape_cast %28 : vector<1x128x128xf32> to vector<128x128xf32>
      %cst_26 = arith.constant dense<0.000000e+00> : vector<1x128xf32>
      %30 = tpu.matmul %27, %29, %cst_26 {dimension_numbers = #tpu.dot_dimension_numbers<[1], [0], [0], [1], [0, 0, 1, 1], [], []>} : vector<1x128xf32>, vector<128x128xf32>, vector<1x128xf32> -> vector<1x128xf32>
      %c2 = arith.constant 2 : index
      %c0_27 = arith.constant 0 : index
      %31 = vector.load %arg4[%c2, %c0_27] : memref<8x128xf32, #tpu.memory_space<vmem>>, vector<1x128xf32>
      %cst_28 = arith.constant 8.000000e+00 : f32
      %32 = vector.broadcast %cst_28 : f32 to vector<1x128xf32>
      %33 = arith.mulf %32, %31 : vector<1x128xf32>
      %34 = arith.addf %30, %33 : vector<1x128xf32>
      %c2_29 = arith.constant 2 : index
      %c0_30 = arith.constant 0 : index
      %c0_31 = arith.constant 0 : index
      %35 = vector.load %arg3[%c2_29, %c0_30, %c0_31] : memref<5x128x128xf32, #tpu.memory_space<vmem>>, vector<1x128x128xf32>
      %36 = vector.shape_cast %35 : vector<1x128x128xf32> to vector<128x128xf32>
      %cst_32 = arith.constant dense<0.000000e+00> : vector<1x128xf32>
      %37 = tpu.matmul %34, %36, %cst_32 {dimension_numbers = #tpu.dot_dimension_numbers<[1], [0], [0], [1], [0, 0, 1, 1], [], []>} : vector<1x128xf32>, vector<128x128xf32>, vector<1x128xf32> -> vector<1x128xf32>
      %c3 = arith.constant 3 : index
      %c0_33 = arith.constant 0 : index
      %38 = vector.load %arg4[%c3, %c0_33] : memref<8x128xf32, #tpu.memory_space<vmem>>, vector<1x128xf32>
      %39 = arith.addf %37, %38 : vector<1x128xf32>
      %cst_34 = arith.constant 0.000000e+00 : f32
      %40 = vector.broadcast %cst_34 : f32 to vector<1x128xf32>
      %41 = arith.maximumf %39, %40 : vector<1x128xf32>
      %c3_35 = arith.constant 3 : index
      %c0_36 = arith.constant 0 : index
      %c0_37 = arith.constant 0 : index
      %42 = vector.load %arg3[%c3_35, %c0_36, %c0_37] : memref<5x128x128xf32, #tpu.memory_space<vmem>>, vector<1x128x128xf32>
      %43 = vector.shape_cast %42 : vector<1x128x128xf32> to vector<128x128xf32>
      %cst_38 = arith.constant dense<0.000000e+00> : vector<1x128xf32>
      %44 = tpu.matmul %41, %43, %cst_38 {dimension_numbers = #tpu.dot_dimension_numbers<[1], [0], [0], [1], [0, 0, 1, 1], [], []>} : vector<1x128xf32>, vector<128x128xf32>, vector<1x128xf32> -> vector<1x128xf32>
      %c4 = arith.constant 4 : index
      %c0_39 = arith.constant 0 : index
      %45 = vector.load %arg4[%c4, %c0_39] : memref<8x128xf32, #tpu.memory_space<vmem>>, vector<1x128xf32>
      %46 = arith.addf %44, %45 : vector<1x128xf32>
      %cst_40 = arith.constant 0.000000e+00 : f32
      %47 = vector.broadcast %cst_40 : f32 to vector<1x128xf32>
      %48 = arith.maximumf %46, %47 : vector<1x128xf32>
      %c4_41 = arith.constant 4 : index
      %c0_42 = arith.constant 0 : index
      %c0_43 = arith.constant 0 : index
      %49 = vector.load %arg3[%c4_41, %c0_42, %c0_43] : memref<5x128x128xf32, #tpu.memory_space<vmem>>, vector<1x128x128xf32>
      %50 = vector.shape_cast %49 : vector<1x128x128xf32> to vector<128x128xf32>
      %cst_44 = arith.constant dense<0.000000e+00> : vector<1x128xf32>
      %51 = tpu.matmul %48, %50, %cst_44 {dimension_numbers = #tpu.dot_dimension_numbers<[1], [0], [0], [1], [0, 0, 1, 1], [], []>} : vector<1x128xf32>, vector<128x128xf32>, vector<1x128xf32> -> vector<1x128xf32>
      %c5 = arith.constant 5 : index
      %c0_45 = arith.constant 0 : index
      %52 = vector.load %arg4[%c5, %c0_45] : memref<8x128xf32, #tpu.memory_space<vmem>>, vector<1x128xf32>
      %53 = arith.addf %51, %52 : vector<1x128xf32>
      %c0_46 = arith.constant 0 : index
      %c0_47 = arith.constant 0 : index
      %54 = vector.load %arg5[%c0_46, %c0_47] : memref<1x128xf32, #tpu.memory_space<vmem>>, vector<1x128xf32>
      tpu.vector_store %arg5[%c0_46, %c0_47], %53 {strides = array<i32>} : memref<1x128xf32, #tpu.memory_space<vmem>>, vector<1x128xf32>,
    } else {
    }
    return
  }
  func.func @transform_0(%arg0: i32) -> (i32, i32) {
    %c0_i32 = arith.constant 0 : i32
    %c0_i32_0 = arith.constant 0 : i32
    return %arg0, %c0_i32 : i32, i32
  }
  func.func @transform_1(%arg0: i32) -> (i32, i32) {
    %c0_i32 = arith.constant 0 : i32
    %c0_i32_0 = arith.constant 0 : i32
    %c0_i32_1 = arith.constant 0 : i32
    return %c0_i32, %c0_i32_0 : i32, i32
  }
  func.func @transform_2(%arg0: i32) -> (i32, i32, i32) {
    %c0_i32 = arith.constant 0 : i32
    %c0_i32_0 = arith.constant 0 : i32
    %c0_i32_1 = arith.constant 0 : i32
    %c0_i32_2 = arith.constant 0 : i32
    return %c0_i32, %c0_i32_0, %c0_i32_1 : i32, i32, i32
  }
  func.func @transform_3(%arg0: i32) -> (i32, i32) {
    %c0_i32 = arith.constant 0 : i32
    %c0_i32_0 = arith.constant 0 : i32
    %c0_i32_1 = arith.constant 0 : i32
    return %c0_i32, %c0_i32_0 : i32, i32
  }
  func.func @transform_4(%arg0: i32) -> (i32, i32) {
    %c0_i32 = arith.constant 0 : i32
    %c0_i32_0 = arith.constant 0 : i32
    %c0_i32_1 = arith.constant 0 : i32
    return %c0_i32, %c0_i32_0 : i32, i32
  }
}

</mosaic_0001>

<llo_original>
// kernel: tpu_custom_call.1
$region0: #{tpu_custom_call.1}
  #allocation0 [shape = 'u32[]', space=smem, size = 0x4, offset = 0x4, fixed_abs, tag = 'smem constant byte address 0x4 - core index']
  #allocation1 [shape = 'u32[72,128]{1,0:T(1,128)}', space=vmem, size = 0x9000, scoped, tag = 'internal scratch']
  #allocation2 [shape = 'f32[1,128]{1,0:T(1,128)}', space=vmem, size = 0x200, scoped, tag = 'scratch operand']
  %s0 = inlined_call_operand.hbm [shape: f32[8,16], index: 0, kind: input, shape index: {}]
  %s1 = inlined_call_operand.hbm [shape: f32[16,128], index: 1, kind: input, shape index: {}]
  %s2 = inlined_call_operand.hbm [shape: f32[5,128,128], index: 2, kind: input, shape index: {}]
  %s3 = inlined_call_operand.hbm [shape: f32[8,128], index: 3, kind: input, shape index: {}]
  %s4 = inlined_call_operand.hbm [shape: f32[1,128], index: 4, kind: output, shape index: {}]
  %s5 = sld [smem:[#allocation0]]
  $region50: #{tpu_custom_call.1} parent=0
    _
  %s7 = ssub.s32 1, %s5
  %s8 = scalar_select 0, %s7, %s5
  $region1: #{tpu_custom_call.1} parent=0
    #allocation3 [shape = 'u8[4096]{0}', space=vmem, size = 0x1000, scoped, tag = 'input window, operand 0, single buffered']
    #allocation4 [shape = 's32[1]{0}', space=sflag, size = 0x4, scoped, tag = 'scoped memory for tpu_custom_call.1']
    #allocation5 [shape = 's32[1]{0}', space=sflag, size = 0x4, scoped, tag = 'scoped memory for tpu_custom_call.1']
    #allocation6 [shape = 'u8[8192]{0}', space=vmem, size = 0x2000, scoped, tag = 'input window, operand 1, single buffered']
    #allocation7 [shape = 's32[1]{0}', space=sflag, size = 0x4, scoped, tag = 'scoped memory for tpu_custom_call.1']
    #allocation8 [shape = 'u8[327680]{0}', space=vmem, size = 0x50000, scoped, tag = 'input window, operand 2, single buffered']
    #allocation9 [shape = 'u8[4096]{0}', space=vmem, size = 0x1000, scoped, tag = 'input window, operand 3, single buffered']
    #allocation10 [shape = 's32[1]{0}', space=sflag, size = 0x4, scoped, tag = 'scoped memory for tpu_custom_call.1']
    #allocation11 [shape = 'u8[512]{0}', space=vmem, size = 0x400, scoped, tag = 'output window, operand 0, single buffered']
    %9 = vsyncpa [#allocation4], 0
    %10 = vsyncpa [#allocation7], 0
    %11 = vsyncpa [#allocation10], 0
    %12 = vsyncpa [#allocation5], 0
    // Predicated region
    $region2: #{tpu_custom_call.1} parent=1 // pred_check
      _
    $region3: #{tpu_custom_call.1} parent=1 // pred_check_branch
      %14 = sbr.rel (0) target = $region5
    $region4: #{tpu_custom_call.1} parent=1 // pred_region
      %16 = vsyncadd [#allocation4], 0
      %s18 = sshll.u32 %s0, 4
      %s19 = int_to_ptr.hbm [resolvable:$true] %s18
      %s20 = sshll.u32 [#allocation3], 4
      %s21 = int_to_ptr.vmem [resolvable:$true] %s20
      %23 = dma.hbm_to_vmem [thread:$0]  %s19, 128, %s21, [#allocation4]
    $region5: #{tpu_custom_call.1} parent=1 // pred_fallthru
      _
    // Predicated region
    $region6: #{tpu_custom_call.1} parent=1 // pred_check
      _
    $region7: #{tpu_custom_call.1} parent=1 // pred_check_branch
      %25 = sbr.rel (0) target = $region9
    $region8: #{tpu_custom_call.1} parent=1 // pred_region
      %27 = vsyncadd [#allocation7], 0
      %s28 = sshll.u32 %s1, 4
      %s29 = int_to_ptr.hbm [resolvable:$true] %s28
      %s30 = sshll.u32 [#allocation6], 4
      %s31 = int_to_ptr.vmem [resolvable:$true] %s30
      %36 = dma.hbm_to_vmem [thread:$0]  %s29, 256, %s31, [#allocation7], 128, 128, 8
    $region9: #{tpu_custom_call.1} parent=1 // pred_fallthru
      _
    // Predicated region
    $region10: #{tpu_custom_call.1} parent=1 // pred_check
      _
    $region11: #{tpu_custom_call.1} parent=1 // pred_check_branch
      %38 = sbr.rel (0) target = $region13
    $region12: #{tpu_custom_call.1} parent=1 // pred_region
      %40 = vsyncadd [#allocation7], 0
      %s41 = sshll.u32 %s2, 4
      %s42 = int_to_ptr.hbm [resolvable:$true] %s41
      %s43 = sshll.u32 [#allocation8], 4
      %s44 = int_to_ptr.vmem [resolvable:$true] %s43
      %49 = dma.hbm_to_vmem [thread:$0]  %s42, 10240, %s44, [#allocation7], 128, 128, 8
    $region13: #{tpu_custom_call.1} parent=1 // pred_fallthru
      _
    // Predicated region
    $region14: #{tpu_custom_call.1} parent=1 // pred_check
      _
    $region15: #{tpu_custom_call.1} parent=1 // pred_check_branch
      %51 = sbr.rel (0) target = $region17
    $region16: #{tpu_custom_call.1} parent=1 // pred_region
      %53 = vsyncadd [#allocation10], 0
      %s55 = sshll.u32 %s3, 4
      %s56 = int_to_ptr.hbm [resolvable:$true] %s55
      %s57 = sshll.u32 [#allocation9], 4
      %s58 = int_to_ptr.vmem [resolvable:$true] %s57
      %60 = dma.hbm_to_vmem [thread:$0]  %s56, 128, %s58, [#allocation10]
    $region17: #{tpu_custom_call.1} parent=1 // pred_fallthru
      _
    // Predicated region
    $region18: #{tpu_custom_call.1} parent=1 // pred_check
      _
    $region19: #{tpu_custom_call.1} parent=1 // pred_check_branch
      %62 = sbr.rel (0) target = $region21
    $region20: #{tpu_custom_call.1} parent=1 // pred_region
      %64 = dma.done [#allocation4], 128
    $region21: #{tpu_custom_call.1} parent=1 // pred_fallthru
      _
    // Predicated region
    $region22: #{tpu_custom_call.1} parent=1 // pred_check
      _
    $region23: #{tpu_custom_call.1} parent=1 // pred_check_branch
      %66 = sbr.rel (0) target = $region25
    $region24: #{tpu_custom_call.1} parent=1 // pred_region
      %68 = dma.done [#allocation7], 256
    $region25: #{tpu_custom_call.1} parent=1 // pred_fallthru
      _
    // Predicated region
    $region26: #{tpu_custom_call.1} parent=1 // pred_check
      _
    $region27: #{tpu_custom_call.1} parent=1 // pred_check_branch
      %70 = sbr.rel (0) target = $region29
    $region28: #{tpu_custom_call.1} parent=1 // pred_region
      %72 = dma.done [#allocation7], 10240
    $region29: #{tpu_custom_call.1} parent=1 // pred_fallthru
      _
    // Predicated region
    $region30: #{tpu_custom_call.1} parent=1 // pred_check
      _
    $region31: #{tpu_custom_call.1} parent=1 // pred_check_branch
      %74 = sbr.rel (0) target = $region33
    $region32: #{tpu_custom_call.1} parent=1 // pred_region
      %76 = dma.done [#allocation10], 128
    $region33: #{tpu_custom_call.1} parent=1 // pred_fallthru
      _
    %p77 = scmp.eq.s32.totalorder 0, 0
    // Predicated region
    $region34: #{tpu_custom_call.1} parent=1 // pred_check
      %p78 = pneg %p77
    $region35: #{tpu_custom_call.1} parent=1 // pred_check_branch
      %80 = sbr.rel (%p78) target = $region37
    $region36: #{tpu_custom_call.1} parent=1 // pred_region
      %81 = vst [vmem:[#allocation2] sm:$0x1] 0.0
    $region37: #{tpu_custom_call.1} parent=1 // pred_fallthru
      _
    %v82 = vld [vmem:[#allocation3] sm:$0xff]
    %v83 = vld [vmem:[#allocation6] sm:$0xff]
    %v84 = vld [vmem:[#allocation6 + $0x8] sm:$0xff]
    %v85 = vld [vmem:[#allocation9] sm:$0x1]
    %v86 = vperm.slane %v85, 0
    %vm87 = vcmask 130048
    %v89 = vsel %vm87, %v82, 0
    %91 = vmatpush.msra.mxu0 0.0
    %92 = vmatpush.msra.mxu0 0.0
    %93 = vmatpush.msra.mxu0 0.0
    %94 = vmatpush.msra.mxu0 0.0
    %95 = vmatpush.msra.mxu0 0.0
    %96 = vmatpush.msra.mxu0 0.0
    %97 = vmatpush.msra.mxu0 0.0
    %98 = vmatpush.msra.mxu0 0.0
    %99 = vmatpush.msra.mxu0 0.0
    %100 = vmatpush.msra.mxu0 0.0
    %101 = vmatpush.msra.mxu0 0.0
    %102 = vmatpush.msra.mxu0 0.0
    %103 = vmatpush.msra.mxu0 0.0
    %104 = vmatpush.msra.mxu0 0.0
    %105 = vmatpush.msra.mxu0 %v84
    %106 = vmatpush.msra.mxu0 %v83
    %107 = vmatmul.f32.gmra.mxu0 %v89
    %v108 = vpop.f32.mrf.mxu0
    %v109 = vadd.f32 %v86, %v108
    %110 = vdwg.mxu0
    %v111 = vmax.f32 %v109, 0.0
    %v112 = vld [vmem:[#allocation8] sm:$0xff]
    %v113 = vld [vmem:[#allocation8 + $0x8] sm:$0xff]
    %v114 = vld [vmem:[#allocation8 + $0x10] sm:$0xff]
    %v115 = vld [vmem:[#allocation8 + $0x18] sm:$0xff]
    %v116 = vld [vmem:[#allocation8 + $0x20] sm:$0xff]
    %v117 = vld [vmem:[#allocation8 + $0x28] sm:$0xff]
    %v118 = vld [vmem:[#allocation8 + $0x30] sm:$0xff]
    %v119 = vld [vmem:[#allocation8 + $0x38] sm:$0xff]
    %v120 = vld [vmem:[#allocation8 + $0x40] sm:$0xff]
    %v121 = vld [vmem:[#allocation8 + $0x48] sm:$0xff]
    %v122 = vld [vmem:[#allocation8 + $0x50] sm:$0xff]
    %v123 = vld [vmem:[#allocation8 + $0x58] sm:$0xff]
    %v124 = vld [vmem:[#allocation8 + $0x60] sm:$0xff]
    %v125 = vld [vmem:[#allocation8 + $0x68] sm:$0xff]
    %v126 = vld [vmem:[#allocation8 + $0x70] sm:$0xff]
    %v127 = vld [vmem:[#allocation8 + $0x78] sm:$0xff]
    %v128 = vld [vmem:[#allocation9 + $0x1] sm:$0x1]
    %v129 = vperm.slane %v128, 0
    %130 = vmatpush.msra.mxu0 %v127
    %131 = vmatpush.msra.mxu0 %v126
    %132 = vmatpush.msra.mxu0 %v125
    %133 = vmatpush.msra.mxu0 %v124
    %134 = vmatpush.msra.mxu0 %v123
    %135 = vmatpush.msra.mxu0 %v122
    %136 = vmatpush.msra.mxu0 %v121
    %137 = vmatpush.msra.mxu0 %v120
    %138 = vmatpush.msra.mxu0 %v119
    %139 = vmatpush.msra.mxu0 %v118
    %140 = vmatpush.msra.mxu0 %v117
    %141 = vmatpush.msra.mxu0 %v116
    %142 = vmatpush.msra.mxu0 %v115
    %143 = vmatpush.msra.mxu0 %v114
    %144 = vmatpush.msra.mxu0 %v113
    %145 = vmatpush.msra.mxu0 %v112
    %146 = vmatmul.f32.gmra.mxu0 %v111
    %v147 = vpop.f32.mrf.mxu0
    %v148 = vadd.f32 %v129, %v147
    %149 = vdwg.mxu0
    %v150 = vmax.f32 %v148, 0.0
    %v151 = vld [vmem:[#allocation2] sm:$0x1]
    %vm152 = vcmask 64512
    %v154 = vsel %vm152, 1.0, 0
    %156 = vmatpush.msra.mxu0 0.0
    %157 = vmatpush.msra.mxu0 0.0
    %158 = vmatpush.msra.mxu0 0.0
    %159 = vmatpush.msra.mxu0 0.0
    %160 = vmatpush.msra.mxu0 0.0
    %161 = vmatpush.msra.mxu0 0.0
    %162 = vmatpush.msra.mxu0 0.0
    %163 = vmatpush.msra.mxu0 0.0
    %164 = vmatpush.msra.mxu0 0.0
    %165 = vmatpush.msra.mxu0 0.0
    %166 = vmatpush.msra.mxu0 0.0
    %167 = vmatpush.msra.mxu0 0.0
    %168 = vmatpush.msra.mxu0 0.0
    %169 = vmatpush.msra.mxu0 0.0
    %170 = vmatpush.msra.mxu0 0.0
    %171 = vmatpush.msra.mxu0 %v150
    %172 = vmatmul.f32.gmra.mxu0 %v154
    %v173 = vpop.f32.mrf.mxu0
    %v174 = vadd.f32 0.0, %v173
    %175 = vdwg.mxu0
    %v176 = vadd.f32 %v151, %v174
    %177 = vst [vmem:[#allocation2] sm:$0x1] %v176
    // Predicated region
    $region38: #{tpu_custom_call.1} parent=1 // pred_check
      %p178 = pneg %p77
    $region39: #{tpu_custom_call.1} parent=1 // pred_check_branch
      %180 = sbr.rel (%p178) target = $region41
    $region40: #{tpu_custom_call.1} parent=1 // pred_region
      %v181 = vld [vmem:[#allocation2] sm:$0x1]
      %s182 = scalar_lea.vmem [#allocation8], 128
      %v183 = vld [vmem:[%s182] sm:$0xff]
      %v184 = vld [vmem:[%s182 + $0x8] sm:$0xff]
      %v185 = vld [vmem:[%s182 + $0x10] sm:$0xff]
      %v186 = vld [vmem:[%s182 + $0x18] sm:$0xff]
      %v187 = vld [vmem:[%s182 + $0x20] sm:$0xff]
      %v188 = vld [vmem:[%s182 + $0x28] sm:$0xff]
      %v189 = vld [vmem:[%s182 + $0x30] sm:$0xff]
      %v190 = vld [vmem:[%s182 + $0x38] sm:$0xff]
      %v191 = vld [vmem:[%s182 + $0x40] sm:$0xff]
      %v192 = vld [vmem:[%s182 + $0x48] sm:$0xff]
      %v193 = vld [vmem:[%s182 + $0x50] sm:$0xff]
      %v194 = vld [vmem:[%s182 + $0x58] sm:$0xff]
      %v195 = vld [vmem:[%s182 + $0x60] sm:$0xff]
      %v196 = vld [vmem:[%s182 + $0x68] sm:$0xff]
      %v197 = vld [vmem:[%s182 + $0x70] sm:$0xff]
      %v198 = vld [vmem:[%s182 + $0x78] sm:$0xff]
      %v199 = vld [vmem:[#allocation9 + $0x2] sm:$0x1]
      %v200 = vmul.f32 %v199, 8.0
      %201 = vmatpush.msra.mxu0 %v198
      %202 = vmatpush.msra.mxu0 %v197
      %203 = vmatpush.msra.mxu0 %v196
      %204 = vmatpush.msra.mxu0 %v195
      %205 = vmatpush.msra.mxu0 %v194
      %206 = vmatpush.msra.mxu0 %v193
      %207 = vmatpush.msra.mxu0 %v192
      %208 = vmatpush.msra.mxu0 %v191
      %209 = vmatpush.msra.mxu0 %v190
      %210 = vmatpush.msra.mxu0 %v189
      %211 = vmatpush.msra.mxu0 %v188
      %212 = vmatpush.msra.mxu0 %v187
      %213 = vmatpush.msra.mxu0 %v186
      %214 = vmatpush.msra.mxu0 %v185
      %215 = vmatpush.msra.mxu0 %v184
      %216 = vmatpush.msra.mxu0 %v183
      %217 = vmatmul.f32.gmra.mxu0 %v181
      %v218 = vpop.f32.mrf.mxu0
      %v219 = vadd.f32 %v200, %v218
      %220 = vdwg.mxu0
      %s221 = scalar_lea.vmem [#allocation8], 256
      %v222 = vld [vmem:[%s221] sm:$0xff]
      %v223 = vld [vmem:[%s221 + $0x8] sm:$0xff]
      %v224 = vld [vmem:[%s221 + $0x10] sm:$0xff]
      %v225 = vld [vmem:[%s221 + $0x18] sm:$0xff]
      %v226 = vld [vmem:[%s221 + $0x20] sm:$0xff]
      %v227 = vld [vmem:[%s221 + $0x28] sm:$0xff]
      %v228 = vld [vmem:[%s221 + $0x30] sm:$0xff]
      %v229 = vld [vmem:[%s221 + $0x38] sm:$0xff]
      %v230 = vld [vmem:[%s221 + $0x40] sm:$0xff]
      %v231 = vld [vmem:[%s221 + $0x48] sm:$0xff]
      %v232 = vld [vmem:[%s221 + $0x50] sm:$0xff]
      %v233 = vld [vmem:[%s221 + $0x58] sm:$0xff]
      %v234 = vld [vmem:[%s221 + $0x60] sm:$0xff]
      %v235 = vld [vmem:[%s221 + $0x68] sm:$0xff]
      %v236 = vld [vmem:[%s221 + $0x70] sm:$0xff]
      %v237 = vld [vmem:[%s221 + $0x78] sm:$0xff]
      %v238 = vld [vmem:[#allocation9 + $0x3] sm:$0x1]
      %239 = vmatpush.msra.mxu0 %v237
      %240 = vmatpush.msra.mxu0 %v236
      %241 = vmatpush.msra.mxu0 %v235
      %242 = vmatpush.msra.mxu0 %v234
      %243 = vmatpush.msra.mxu0 %v233
      %244 = vmatpush.msra.mxu0 %v232
      %245 = vmatpush.msra.mxu0 %v231
      %246 = vmatpush.msra.mxu0 %v230
      %247 = vmatpush.msra.mxu0 %v229
      %248 = vmatpush.msra.mxu0 %v228
      %249 = vmatpush.msra.mxu0 %v227
      %250 = vmatpush.msra.mxu0 %v226
      %251 = vmatpush.msra.mxu0 %v225
      %252 = vmatpush.msra.mxu0 %v224
      %253 = vmatpush.msra.mxu0 %v223
      %254 = vmatpush.msra.mxu0 %v222
      %255 = vmatmul.f32.gmra.mxu0 %v219
      %v256 = vpop.f32.mrf.mxu0
      %v257 = vadd.f32 %v238, %v256
      %258 = vdwg.mxu0
      %v259 = vmax.f32 %v257, 0.0
      %s260 = scalar_lea.vmem [#allocation8], 384
      %v261 = vld [vmem:[%s260] sm:$0xff]
      %v262 = vld [vmem:[%s260 + $0x8] sm:$0xff]
      %v263 = vld [vmem:[%s260 + $0x10] sm:$0xff]
      %v264 = vld [vmem:[%s260 + $0x18] sm:$0xff]
      %v265 = vld [vmem:[%s260 + $0x20] sm:$0xff]
      %v266 = vld [vmem:[%s260 + $0x28] sm:$0xff]
      %v267 = vld [vmem:[%s260 + $0x30] sm:$0xff]
      %v268 = vld [vmem:[%s260 + $0x38] sm:$0xff]
      %v269 = vld [vmem:[%s260 + $0x40] sm:$0xff]
      %v270 = vld [vmem:[%s260 + $0x48] sm:$0xff]
      %v271 = vld [vmem:[%s260 + $0x50] sm:$0xff]
      %v272 = vld [vmem:[%s260 + $0x58] sm:$0xff]
      %v273 = vld [vmem:[%s260 + $0x60] sm:$0xff]
      %v274 = vld [vmem:[%s260 + $0x68] sm:$0xff]
      %v275 = vld [vmem:[%s260 + $0x70] sm:$0xff]
      %v276 = vld [vmem:[%s260 + $0x78] sm:$0xff]
      %v277 = vld [vmem:[#allocation9 + $0x4] sm:$0x1]
      %278 = vmatpush.msra.mxu0 %v276
      %279 = vmatpush.msra.mxu0 %v275
      %280 = vmatpush.msra.mxu0 %v274
      %281 = vmatpush.msra.mxu0 %v273
      %282 = vmatpush.msra.mxu0 %v272
      %283 = vmatpush.msra.mxu0 %v271
      %284 = vmatpush.msra.mxu0 %v270
      %285 = vmatpush.msra.mxu0 %v269
      %286 = vmatpush.msra.mxu0 %v268
      %287 = vmatpush.msra.mxu0 %v267
      %288 = vmatpush.msra.mxu0 %v266
      %289 = vmatpush.msra.mxu0 %v265
      %290 = vmatpush.msra.mxu0 %v264
      %291 = vmatpush.msra.mxu0 %v263
      %292 = vmatpush.msra.mxu0 %v262
      %293 = vmatpush.msra.mxu0 %v261
      %294 = vmatmul.f32.gmra.mxu0 %v259
      %v295 = vpop.f32.mrf.mxu0
      %v296 = vadd.f32 %v277, %v295
      %297 = vdwg.mxu0
      %v298 = vmax.f32 %v296, 0.0
      %s299 = scalar_lea.vmem [#allocation8], 512
      %v300 = vld [vmem:[%s299] sm:$0xff]
      %v301 = vld [vmem:[%s299 + $0x8] sm:$0xff]
      %v302 = vld [vmem:[%s299 + $0x10] sm:$0xff]
      %v303 = vld [vmem:[%s299 + $0x18] sm:$0xff]
      %v304 = vld [vmem:[%s299 + $0x20] sm:$0xff]
      %v305 = vld [vmem:[%s299 + $0x28] sm:$0xff]
      %v306 = vld [vmem:[%s299 + $0x30] sm:$0xff]
      %v307 = vld [vmem:[%s299 + $0x38] sm:$0xff]
      %v308 = vld [vmem:[%s299 + $0x40] sm:$0xff]
      %v309 = vld [vmem:[%s299 + $0x48] sm:$0xff]
      %v310 = vld [vmem:[%s299 + $0x50] sm:$0xff]
      %v311 = vld [vmem:[%s299 + $0x58] sm:$0xff]
      %v312 = vld [vmem:[%s299 + $0x60] sm:$0xff]
      %v313 = vld [vmem:[%s299 + $0x68] sm:$0xff]
      %v314 = vld [vmem:[%s299 + $0x70] sm:$0xff]
      %v315 = vld [vmem:[%s299 + $0x78] sm:$0xff]
      %v316 = vld [vmem:[#allocation9 + $0x5] sm:$0x1]
      %317 = vmatpush.msra.mxu0 %v315
      %318 = vmatpush.msra.mxu0 %v314
      %319 = vmatpush.msra.mxu0 %v313
      %320 = vmatpush.msra.mxu0 %v312
      %321 = vmatpush.msra.mxu0 %v311
      %322 = vmatpush.msra.mxu0 %v310
      %323 = vmatpush.msra.mxu0 %v309
      %324 = vmatpush.msra.mxu0 %v308
      %325 = vmatpush.msra.mxu0 %v307
      %326 = vmatpush.msra.mxu0 %v306
      %327 = vmatpush.msra.mxu0 %v305
      %328 = vmatpush.msra.mxu0 %v304
      %329 = vmatpush.msra.mxu0 %v303
      %330 = vmatpush.msra.mxu0 %v302
      %331 = vmatpush.msra.mxu0 %v301
      %332 = vmatpush.msra.mxu0 %v300
      %333 = vmatmul.f32.gmra.mxu0 %v298
      %v334 = vpop.f32.mrf.mxu0
      %v335 = vadd.f32 %v316, %v334
      %336 = vdwg.mxu0
      %337 = vst [vmem:[#allocation11] sm:$0x1] %v335
    $region41: #{tpu_custom_call.1} parent=1 // pred_fallthru
      _
    // Predicated region
    $region42: #{tpu_custom_call.1} parent=1 // pred_check
      _
    $region43: #{tpu_custom_call.1} parent=1 // pred_check_branch
      %339 = sbr.rel (0) target = $region45
    $region44: #{tpu_custom_call.1} parent=1 // pred_region
      %341 = vsyncadd [#allocation5], 0
      %s343 = sshll.u32 [#allocation11], 4
      %s344 = int_to_ptr.vmem [resolvable:$true] %s343
      %s345 = sshll.u32 %s4, 4
      %s346 = int_to_ptr.hbm [resolvable:$true] %s345
      %348 = dma.vmem_to_hbm [thread:$0]  %s344, 16, %s346, [#allocation5]
    $region45: #{tpu_custom_call.1} parent=1 // pred_fallthru
      _
    // Predicated region
    $region46: #{tpu_custom_call.1} parent=1 // pred_check
      _
    $region47: #{tpu_custom_call.1} parent=1 // pred_check_branch
      %350 = sbr.rel (0) target = $region49
    $region48: #{tpu_custom_call.1} parent=1 // pred_region
      %352 = dma.done [#allocation5], 16
    $region49: #{tpu_custom_call.1} parent=1 // pred_fallthru
      _
    %353 = vsyncpa [#allocation4], 1
    %354 = vsyncpa [#allocation7], 1
    %355 = vsyncpa [#allocation10], 1
    %356 = vsyncpa [#allocation5], 1

</llo_original>
